<compile_context>
chip_gen: v5e
topology: v5e:2x2
jax: 0.10.0
libtpu: 0.0.40
codegen_flags: <defaults>
</compile_context>

<pallas_src>
import functools
import math

import jax
import jax.numpy as jnp
from jax.experimental import pallas as pl
from jax.experimental.pallas import tpu as pltpu


# ----------------------------- Pallas kernel --------------------------------
def _intensity_kernel(r_ref, x_ref, o_ref, *, scale):
    # r_ref: (tb, 1) f32   x_ref / o_ref: (tb, tc)
    r = r_ref[...]
    noise = 1.0 + scale * jnp.clip(r, -2.0, 2.0)           # (tb, 1)
    xv = x_ref[...].astype(jnp.float32)
    o_ref[...] = (xv * noise).astype(o_ref.dtype)          # lane-broadcast multiply


# ------------------------------- wrapper -------------------------------------
def intensity_pallas(x, r, scale, *, vmem_block_budget_bytes=4 * 1024 * 1024):
    """x: (B, ...) array; r: (B,) standard-normal draws; scale: python float."""
    orig_shape = x.shape
    B = orig_shape[0]
    chw = int(math.prod(orig_shape[1:]))
    x2 = x.reshape(B, chw)                       # lane-dense 2D view
    r2 = r.reshape(B, 1).astype(jnp.float32)

    # Row (batch) tile: whole batch in one grid step if it fits the budget,
    # otherwise a multiple-of-8 row tile (satisfies the (8,128) constraint).
    row_bytes = chw * x2.dtype.itemsize
    rows_fit = max(1, vmem_block_budget_bytes // max(1, row_bytes))
    if rows_fit >= B:
        tb = B
    else:
        tb = max(8, (rows_fit // 8) * 8)
        tb = min(tb, B)
        if tb % 8 != 0:                          # tiny batch: just take it all
            tb = B

    grid = (pl.cdiv(B, tb),)
    out = pl.pallas_call(
        functools.partial(_intensity_kernel, scale=float(scale)),
        out_shape=jax.ShapeDtypeStruct((B, chw), x2.dtype),
        grid=grid,
        in_specs=[
            pl.BlockSpec((tb, 1), lambda i: (i, 0)),       # per-batch noise
            pl.BlockSpec((tb, chw), lambda i: (i, 0)),     # activation rows
        ],
        out_specs=pl.BlockSpec((tb, chw), lambda i: (i, 0)),
        compiler_params=pltpu.CompilerParams(
            dimension_semantics=("parallel",),
        ),
    )(r2, x2)
    return out.reshape(orig_shape)


def intensity_forward(x, key, scale):
    """Matches Intensity.forward: fresh per-batch Gaussian noise each call."""
    r = jax.random.normal(key, (x.shape[0],), jnp.float32)
    return intensity_pallas(x, r, scale), r


# ----------------------- pure-JAX reference (checking) -----------------------
def _ref_intensity(x, r, scale):
    noise = 1.0 + scale * jnp.clip(
        r.reshape((-1,) + (1,) * (x.ndim - 1)), -2.0, 2.0)
    return x * noise.astype(x.dtype)


# ---------------------------------- main --------------------------------------
if __name__ == "__main__":
    scale = 0.05
    B, C, H, W = 2, 4, 16, 16

    key = jax.random.PRNGKey(0)
    k_x, k_r = jax.random.split(key)
    x = jax.random.normal(k_x, (B, C, H, W), jnp.float32)

    out, r = intensity_forward(x, k_r, scale)
    out = jax.block_until_ready(out)
    assert out.shape == (B, C, H, W), out.shape

    ref = _ref_intensity(x, r, scale)
    assert jnp.allclose(out, ref, atol=1e-6, rtol=1e-6), "mismatch vs JAX reference"

    print("KERNEL_OK")
</pallas_src>

<mosaic_0001>
module attributes {stable_mosaic.version = 11 : i64} {
  func.func @_intensity_kernel(%arg0: i32, %arg1: memref<2x1xf32, #tpu.memory_space<vmem>>, %arg2: memref<2x1024xf32, #tpu.memory_space<vmem>>, %arg3: memref<2x1024xf32, #tpu.memory_space<vmem>>) attributes {dimension_semantics = [#tpu.dimension_semantics<parallel>], iteration_bounds = array<i64: 1>, scalar_prefetch = 0 : i64, scratch_operands = 0 : i64, tpu.core_type = #tpu.core_type<tc>, window_params = [{transform_indices = @transform_0, window_bounds = array<i64: 2, 1>}, {transform_indices = @transform_1, window_bounds = array<i64: 2, 1024>}, {transform_indices = @transform_2, window_bounds = array<i64: 2, 1024>}]} {
    %c0 = arith.constant 0 : index
    %c0_0 = arith.constant 0 : index
    %0 = vector.load %arg1[%c0, %c0_0] : memref<2x1xf32, #tpu.memory_space<vmem>>, vector<2x1xf32>
    %cst = arith.constant -2.000000e+00 : f32
    %cst_1 = arith.constant 2.000000e+00 : f32
    %1 = vector.broadcast %cst : f32 to vector<2x1xf32>
    %2 = arith.maximumf %1, %0 : vector<2x1xf32>
    %3 = vector.broadcast %cst_1 : f32 to vector<2x1xf32>
    %4 = arith.minimumf %3, %2 : vector<2x1xf32>
    %cst_2 = arith.constant 5.000000e-02 : f32
    %5 = vector.broadcast %cst_2 : f32 to vector<2x1xf32>
    %6 = arith.mulf %5, %4 : vector<2x1xf32>
    %cst_3 = arith.constant 1.000000e+00 : f32
    %7 = vector.broadcast %cst_3 : f32 to vector<2x1xf32>
    %8 = arith.addf %7, %6 : vector<2x1xf32>
    %c0_4 = arith.constant 0 : index
    %c0_5 = arith.constant 0 : index
    %9 = vector.load %arg2[%c0_4, %c0_5] : memref<2x1024xf32, #tpu.memory_space<vmem>>, vector<2x1024xf32>
    %10 = vector.broadcast %8 : vector<2x1xf32> to vector<2x1024xf32>
    %11 = arith.mulf %9, %10 : vector<2x1024xf32>
    %c0_6 = arith.constant 0 : index
    %c0_7 = arith.constant 0 : index
    %12 = vector.load %arg3[%c0_6, %c0_7] : memref<2x1024xf32, #tpu.memory_space<vmem>>, vector<2x1024xf32>
    tpu.vector_store %arg3[%c0_6, %c0_7], %11 {strides = array<i32>} : memref<2x1024xf32, #tpu.memory_space<vmem>>, vector<2x1024xf32>,
    return
  }
  func.func @transform_0(%arg0: i32) -> (i32, i32) {
    %c0_i32 = arith.constant 0 : i32
    %c0_i32_0 = arith.constant 0 : i32
    return %arg0, %c0_i32 : i32, i32
  }
  func.func @transform_1(%arg0: i32) -> (i32, i32) {
    %c0_i32 = arith.constant 0 : i32
    %c0_i32_0 = arith.constant 0 : i32
    return %arg0, %c0_i32 : i32, i32
  }
  func.func @transform_2(%arg0: i32) -> (i32, i32) {
    %c0_i32 = arith.constant 0 : i32
    %c0_i32_0 = arith.constant 0 : i32
    return %arg0, %c0_i32 : i32, i32
  }
}

</mosaic_0001>

<llo_original>
// kernel: tpu_custom_call.1
$region0: #{tpu_custom_call.1}
  #allocation0 [shape = 'u32[]', space=smem, size = 0x4, offset = 0x4, fixed_abs, tag = 'smem constant byte address 0x4 - core index']
  #allocation1 [shape = 'u32[72,128]{1,0:T(1,128)}', space=vmem, size = 0x9000, scoped, tag = 'internal scratch']
  %s0 = inlined_call_operand.vmem [shape: f32[2,1], index: 0, kind: input, shape index: {}]
  %s1 = inlined_call_operand.hbm [shape: f32[2,1024], index: 1, kind: input, shape index: {}]
  %s2 = inlined_call_operand.hbm [shape: f32[2,1024], index: 2, kind: output, shape index: {}]
  %s3 = sld [smem:[#allocation0]]
  $region22: #{tpu_custom_call.1} parent=0
    _
  %s5 = ssub.s32 1, %s3
  %s6 = scalar_select 0, %s5, %s3
  $region1: #{tpu_custom_call.1} parent=0
    #allocation2 [shape = 'u8[8192]{0}', space=vmem, size = 0x2000, scoped, tag = 'input window, operand 1, single buffered']
    #allocation3 [shape = 's32[1]{0}', space=sflag, size = 0x4, scoped, tag = 'scoped memory for tpu_custom_call.1']
    #allocation4 [shape = 's32[1]{0}', space=sflag, size = 0x4, scoped, tag = 'scoped memory for tpu_custom_call.1']
    #allocation5 [shape = 'u8[8192]{0}', space=vmem, size = 0x2000, scoped, tag = 'output window, operand 0, single buffered']
    %7 = vsyncpa [#allocation3], 0
    %8 = vsyncpa [#allocation4], 0
    // Predicated region
    $region2: #{tpu_custom_call.1} parent=1 // pred_check
      _
    $region3: #{tpu_custom_call.1} parent=1 // pred_check_branch
      %10 = sbr.rel (0) target = $region5
    $region4: #{tpu_custom_call.1} parent=1 // pred_region
      _
    $region5: #{tpu_custom_call.1} parent=1 // pred_fallthru
      _
    // Predicated region
    $region6: #{tpu_custom_call.1} parent=1 // pred_check
      _
    $region7: #{tpu_custom_call.1} parent=1 // pred_check_branch
      %12 = sbr.rel (0) target = $region9
    $region8: #{tpu_custom_call.1} parent=1 // pred_region
      %14 = vsyncadd [#allocation3], 0
      %s16 = sshll.u32 %s1, 4
      %s17 = int_to_ptr.hbm [resolvable:$true] %s16
      %s18 = sshll.u32 [#allocation2], 4
      %s19 = int_to_ptr.vmem [resolvable:$true] %s18
      %21 = dma.hbm_to_vmem [thread:$0]  %s17, 256, %s19, [#allocation3]
    $region9: #{tpu_custom_call.1} parent=1 // pred_fallthru
      _
    // Predicated region
    $region10: #{tpu_custom_call.1} parent=1 // pred_check
      _
    $region11: #{tpu_custom_call.1} parent=1 // pred_check_branch
      %23 = sbr.rel (0) target = $region13
    $region12: #{tpu_custom_call.1} parent=1 // pred_region
      %25 = dma.done [#allocation3], 256
    $region13: #{tpu_custom_call.1} parent=1 // pred_fallthru
      _
    %v26 = vld [vmem:[%s0] sm:$0x3]
    %v27 = vmax.f32 %v26, -2.0
    %v28 = vmin.f32 %v27, 2.0
    %v29 = vmul.f32 %v28, 0.05
    %v30 = vadd.f32 %v29, 1.0
    %v31 = vld [vmem:[#allocation2] sm:$0xff]
    %v32 = vld [vmem:[#allocation2 + $0x8] sm:$0xff]
    %34 = vset.pattern.permute.xlu0 0
    %35 = vperm.xlu0 %34, %v30
    %v36 = vpop.permute.xlu0 %35
    %v38 = vunpack.c.l.s4 269488144
    %v39 = vunpack.c.0.s8 %v38
    %v40 = vperm.slane %v36, %v39
    %v42 = vmul.f32 %v31, %v40
    %v43 = vmul.f32 %v32, %v40
    %44 = vst [vmem:[#allocation5] sm:$0xff] %v42
    %45 = vst [vmem:[#allocation5 + $0x8] sm:$0xff] %v43
    // Predicated region
    $region14: #{tpu_custom_call.1} parent=1 // pred_check
      _
    $region15: #{tpu_custom_call.1} parent=1 // pred_check_branch
      %47 = sbr.rel (0) target = $region17
    $region16: #{tpu_custom_call.1} parent=1 // pred_region
      %49 = vsyncadd [#allocation4], 0
      %s51 = sshll.u32 [#allocation5], 4
      %s52 = int_to_ptr.vmem [resolvable:$true] %s51
      %s53 = sshll.u32 %s2, 4
      %s54 = int_to_ptr.hbm [resolvable:$true] %s53
      %56 = dma.vmem_to_hbm [thread:$0]  %s52, 256, %s54, [#allocation4]
    $region17: #{tpu_custom_call.1} parent=1 // pred_fallthru
      _
    // Predicated region
    $region18: #{tpu_custom_call.1} parent=1 // pred_check
      _
    $region19: #{tpu_custom_call.1} parent=1 // pred_check_branch
      %58 = sbr.rel (0) target = $region21
    $region20: #{tpu_custom_call.1} parent=1 // pred_region
      %60 = dma.done [#allocation4], 256
    $region21: #{tpu_custom_call.1} parent=1 // pred_fallthru
      _
    %61 = vsyncpa [#allocation3], 1
    %62 = vsyncpa [#allocation4], 1

</llo_original>
